<compile_context>
chip_gen: v5e
topology: v5e:2x2
jax: 0.10.0
libtpu: 0.0.40
codegen_flags: <defaults>
</compile_context>

<pallas_src>
import functools
import math

import jax
import jax.numpy as jnp
from jax.experimental import pallas as pl
from jax.experimental.pallas import tpu as pltpu


def _rope_kernel(cos_ref, sin_a_ref, sin_b_ref, x_ref, o_ref, *, half, tn):
    # cos/sin_a/sin_b : (1, TN) tables in the compute dtype (bf16 or f32).
    # x_ref / o_ref   : (TB, TN) blocks in the I/O dtype.
    compute_dtype = cos_ref.dtype
    x = x_ref[...].astype(compute_dtype)                  # (TB, TN)
    # roll by -half (== +tn-half) aligns x2 under the first-half slots;
    # roll by +half aligns x1 under the second-half slots (XLU lane rotates).
    x_m = pltpu.roll(x, shift=tn - half, axis=1)          # == roll(x, -half)
    x_p = pltpu.roll(x, shift=half, axis=1)               # == roll(x, +half)
    out = x * cos_ref[...] + x_m * sin_a_ref[...] + x_p * sin_b_ref[...]
    o_ref[...] = out.astype(o_ref.dtype)


def _device_params():
    """Per-TPU-generation block / VMEM budgets and bf16-math eligibility."""
    try:
        kind = jax.devices()[0].device_kind.lower()
    except Exception:
        kind = ""
    if "v7" in kind:
        # 64 MiB physical VMEM per TC: smaller blocks, leave headroom.
        return dict(block_bytes=2 * 1024 * 1024,
                    vmem_limit=48 * 1024 * 1024,
                    bf16_math=True)
    if any(t in kind for t in ("v5 lite", "v5e", "v5lite", "v4", "v3", "v2")):
        # No bf16 VALU on these; 128 MiB VMEM allows bigger blocks.
        return dict(block_bytes=4 * 1024 * 1024,
                    vmem_limit=64 * 1024 * 1024,
                    bf16_math=False)
    # v6e / v5p / unknown-but-modern.
    return dict(block_bytes=4 * 1024 * 1024,
                vmem_limit=64 * 1024 * 1024,
                bf16_math=True)


def _choose_tiles(B, N, D, itemsize, target_bytes):
    """Pick (TB, TN): TN a multiple of lcm(D, 128) (or N), TB a multiple of 8 (or B)."""
    unit = (D * 128) // math.gcd(D, 128)                  # lcm(D, 128)
    if N <= unit or N * itemsize * 8 <= target_bytes:
        TN = N
    else:
        max_tn = max(unit, ((target_bytes // (8 * itemsize)) // unit) * unit)
        TN = min(N, max_tn)

    rows_target = max(1, target_bytes // (TN * itemsize))
    if rows_target >= B:
        TB = B
    else:
        TB = min(B, max(8, (rows_target // 8) * 8))

    # Keep at least 2 grid steps when there is enough work (v7x megacore,
    # double-buffered pipelining).
    if pl.cdiv(B, TB) * pl.cdiv(N, TN) == 1 and B >= 16:
        TB = max(8, ((B // 2 + 7) // 8) * 8)
    return TB, TN


def rope2_forward(x: jax.Array, d_model: int, *, block_bytes: int = None,
                  vmem_limit_bytes: int = None) -> jax.Array:
    """RoPE2.forward. x: [..., seq_len, d_model]; output same shape/dtype."""
    assert x.shape[-1] == d_model, f"expected d_model={d_model}, got {x.shape[-1]}"
    assert d_model % 2 == 0, "d_model must be even"
    orig_shape = x.shape
    S = orig_shape[-2]
    D = orig_shape[-1]
    half = D // 2
    B = 1
    for s in orig_shape[:-2]:
        B *= s
    B = max(B, 1)
    N = S * D                                    # flattened lane-dense last dim

    params = _device_params()
    target_bytes = block_bytes if block_bytes is not None else params["block_bytes"]
    vmem_limit = vmem_limit_bytes if vmem_limit_bytes is not None else params["vmem_limit"]
    compute_dtype = (jnp.bfloat16
                     if (x.dtype == jnp.bfloat16 and params["bf16_math"])
                     else jnp.float32)

    x2d = x.reshape(B, N)                        # native dtype, no upcast pass

    # --- trig tables computed once outside the kernel (hoisted) -------------
    theta = 10000.0 ** (-jnp.arange(0, half, dtype=jnp.float32) / half)   # (half,)
    theta2 = jnp.concatenate([theta, theta], axis=0)                      # (D,)
    pos = jnp.arange(S, dtype=jnp.float32)                                # (S,)
    ang = pos[:, None] * theta2[None, :]                                  # (S, D)
    cos = jnp.cos(ang)
    sin = jnp.sin(ang)
    first_half = (jnp.arange(D) < half)[None, :]                          # (1, D)
    sin_a = jnp.where(first_half, -sin, 0.0)     # pairs with roll(x, -half)
    sin_b = jnp.where(first_half, 0.0, sin)      # pairs with roll(x, +half)
    cos_f = cos.reshape(1, N).astype(compute_dtype)
    sin_a_f = sin_a.reshape(1, N).astype(compute_dtype)
    sin_b_f = sin_b.reshape(1, N).astype(compute_dtype)

    # --- tiling: (TB, TN) lane-dense blocks within the VMEM budget ----------
    itemsize = jnp.dtype(x2d.dtype).itemsize
    TB, TN = _choose_tiles(B, N, D, itemsize, target_bytes)

    # N-tile axis outer so table blocks stay resident across the row axis.
    grid = (pl.cdiv(N, TN), pl.cdiv(B, TB))

    kernel = functools.partial(_rope_kernel, half=half, tn=TN)

    out2d = pl.pallas_call(
        kernel,
        out_shape=jax.ShapeDtypeStruct((B, N), x2d.dtype),
        grid_spec=pltpu.PrefetchScalarGridSpec(
            num_scalar_prefetch=0,
            grid=grid,
            in_specs=[
                pl.BlockSpec((1, TN), lambda j, i: (0, j)),    # cos   (per N-tile)
                pl.BlockSpec((1, TN), lambda j, i: (0, j)),    # sin_a (per N-tile)
                pl.BlockSpec((1, TN), lambda j, i: (0, j)),    # sin_b (per N-tile)
                pl.BlockSpec((TB, TN), lambda j, i: (i, j)),   # x block
            ],
            out_specs=pl.BlockSpec((TB, TN), lambda j, i: (i, j)),
        ),
        compiler_params=pltpu.CompilerParams(
            dimension_semantics=("parallel", "parallel"),      # megacore-shardable
            vmem_limit_bytes=vmem_limit,
        ),
    )(cos_f, sin_a_f, sin_b_f, x2d)

    return out2d.reshape(orig_shape)


def _rope2_ref(x: jax.Array, d_model: int) -> jax.Array:
    """Pure-JAX reference mirroring the PyTorch forward (f32 math)."""
    xf = x.astype(jnp.float32)
    S = x.shape[-2]
    half = d_model // 2
    theta = 10000.0 ** (-jnp.arange(0, half, dtype=jnp.float32) / half)
    seq_idx = jnp.arange(S, dtype=jnp.float32)
    idx_theta = jnp.einsum("s,d->sd", seq_idx, theta)
    idx_theta2 = jnp.concatenate([idx_theta, idx_theta], axis=-1)
    cos = jnp.cos(idx_theta2)
    sin = jnp.sin(idx_theta2)
    x1 = xf[..., :half]
    x2 = xf[..., half:]
    rot = jnp.concatenate([-x2, x1], axis=-1)
    return xf * cos + rot * sin


if __name__ == "__main__":
    d_model = 32
    batch, heads, seq = 2, 4, 8
    key = jax.random.PRNGKey(0)
    x = jax.random.normal(key, (batch, heads, seq, d_model), dtype=jnp.float32)

    # float32 path (single-tile grid at this tiny shape)
    out = jax.block_until_ready(rope2_forward(x, d_model))
    ref = _rope2_ref(x, d_model)
    assert out.shape == x.shape and out.dtype == x.dtype
    assert jnp.allclose(out, ref, atol=1e-5, rtol=1e-5), "f32 mismatch vs reference"

    # bf16 path: dtype-preserving I/O; bf16 math on bf16-native chips, f32 otherwise
    x_bf16 = x.astype(jnp.bfloat16)
    out_bf16 = jax.block_until_ready(rope2_forward(x_bf16, d_model))
    assert out_bf16.dtype == jnp.bfloat16 and out_bf16.shape == x.shape
    ref_bf16 = _rope2_ref(x_bf16, d_model)
    assert jnp.allclose(out_bf16.astype(jnp.float32), ref_bf16, atol=1e-1, rtol=1e-1), \
        "bf16 mismatch vs reference"

    # Exercise the N-tiled (multi lane-tile) path at a small shape by forcing a
    # tiny per-block budget: S*D = 512 -> TN = 256, grid = (2, 1).
    x_big = jax.random.normal(jax.random.PRNGKey(1), (2, 4, 16, d_model),
                              dtype=jnp.float32)
    out_big = jax.block_until_ready(
        rope2_forward(x_big, d_model, block_bytes=8 * 1024))
    ref_big = _rope2_ref(x_big, d_model)
    assert jnp.allclose(out_big, ref_big, atol=1e-5, rtol=1e-5), \
        "N-tiled path mismatch vs reference"

    print("KERNEL_OK")
</pallas_src>

<mosaic_0001>
module attributes {stable_mosaic.version = 11 : i64} {
  func.func @_rope_kernel(%arg0: i32, %arg1: i32, %arg2: memref<1x256xf32, #tpu.memory_space<vmem>>, %arg3: memref<1x256xf32, #tpu.memory_space<vmem>>, %arg4: memref<1x256xf32, #tpu.memory_space<vmem>>, %arg5: memref<8x256xf32, #tpu.memory_space<vmem>>, %arg6: memref<8x256xf32, #tpu.memory_space<vmem>>) attributes {dimension_semantics = [#tpu.dimension_semantics<parallel>, #tpu.dimension_semantics<parallel>], iteration_bounds = array<i64: 1, 1>, scalar_prefetch = 0 : i64, scratch_operands = 0 : i64, tpu.core_type = #tpu.core_type<tc>, window_params = [{transform_indices = @transform_0, window_bounds = array<i64: 1, 256>}, {transform_indices = @transform_1, window_bounds = array<i64: 1, 256>}, {transform_indices = @transform_2, window_bounds = array<i64: 1, 256>}, {transform_indices = @transform_3, window_bounds = array<i64: 8, 256>}, {transform_indices = @transform_4, window_bounds = array<i64: 8, 256>}]} {
    %c0 = arith.constant 0 : index
    %c0_0 = arith.constant 0 : index
    %0 = vector.load %arg5[%c0, %c0_0] : memref<8x256xf32, #tpu.memory_space<vmem>>, vector<8x256xf32>
    %c240_i32 = arith.constant 240 : i32
    %1 = tpu.dynamic_rotate %0 by %c240_i32 dim 1 : vector<8x256xf32>, i32 -> vector<8x256xf32>
    %c16_i32 = arith.constant 16 : i32
    %2 = tpu.dynamic_rotate %0 by %c16_i32 dim 1 : vector<8x256xf32>, i32 -> vector<8x256xf32>
    %c0_1 = arith.constant 0 : index
    %c0_2 = arith.constant 0 : index
    %3 = vector.load %arg2[%c0_1, %c0_2] : memref<1x256xf32, #tpu.memory_space<vmem>>, vector<1x256xf32>
    %4 = vector.broadcast %3 : vector<1x256xf32> to vector<8x256xf32>
    %5 = arith.mulf %0, %4 : vector<8x256xf32>
    %c0_3 = arith.constant 0 : index
    %c0_4 = arith.constant 0 : index
    %6 = vector.load %arg3[%c0_3, %c0_4] : memref<1x256xf32, #tpu.memory_space<vmem>>, vector<1x256xf32>
    %7 = vector.broadcast %6 : vector<1x256xf32> to vector<8x256xf32>
    %8 = arith.mulf %1, %7 : vector<8x256xf32>
    %9 = arith.addf %5, %8 : vector<8x256xf32>
    %c0_5 = arith.constant 0 : index
    %c0_6 = arith.constant 0 : index
    %10 = vector.load %arg4[%c0_5, %c0_6] : memref<1x256xf32, #tpu.memory_space<vmem>>, vector<1x256xf32>
    %11 = vector.broadcast %10 : vector<1x256xf32> to vector<8x256xf32>
    %12 = arith.mulf %2, %11 : vector<8x256xf32>
    %13 = arith.addf %9, %12 : vector<8x256xf32>
    %c0_7 = arith.constant 0 : index
    %c0_8 = arith.constant 0 : index
    %14 = vector.load %arg6[%c0_7, %c0_8] : memref<8x256xf32, #tpu.memory_space<vmem>>, vector<8x256xf32>
    tpu.vector_store %arg6[%c0_7, %c0_8], %13 {strides = array<i32>} : memref<8x256xf32, #tpu.memory_space<vmem>>, vector<8x256xf32>,
    return
  }
  func.func @transform_0(%arg0: i32, %arg1: i32) -> (i32, i32) {
    %c0_i32 = arith.constant 0 : i32
    %c0_i32_0 = arith.constant 0 : i32
    return %c0_i32, %arg0 : i32, i32
  }
  func.func @transform_1(%arg0: i32, %arg1: i32) -> (i32, i32) {
    %c0_i32 = arith.constant 0 : i32
    %c0_i32_0 = arith.constant 0 : i32
    return %c0_i32, %arg0 : i32, i32
  }
  func.func @transform_2(%arg0: i32, %arg1: i32) -> (i32, i32) {
    %c0_i32 = arith.constant 0 : i32
    %c0_i32_0 = arith.constant 0 : i32
    return %c0_i32, %arg0 : i32, i32
  }
  func.func @transform_3(%arg0: i32, %arg1: i32) -> (i32, i32) {
    %c0_i32 = arith.constant 0 : i32
    return %arg1, %arg0 : i32, i32
  }
  func.func @transform_4(%arg0: i32, %arg1: i32) -> (i32, i32) {
    %c0_i32 = arith.constant 0 : i32
    return %arg1, %arg0 : i32, i32
  }
}

</mosaic_0001>

<llo_original>
// kernel: tpu_custom_call.1
$region0: #{tpu_custom_call.1}
  #allocation0 [shape = 'u32[]', space=smem, size = 0x4, offset = 0x4, fixed_abs, tag = 'smem constant byte address 0x4 - core index']
  #allocation1 [shape = 'u32[72,128]{1,0:T(1,128)}', space=vmem, size = 0x9000, scoped, tag = 'internal scratch']
  %s0 = inlined_call_operand.hbm [shape: f32[1,256], index: 0, kind: input, shape index: {}]
  %s1 = inlined_call_operand.hbm [shape: f32[1,256], index: 1, kind: input, shape index: {}]
  %s2 = inlined_call_operand.hbm [shape: f32[1,256], index: 2, kind: input, shape index: {}]
  %s3 = inlined_call_operand.hbm [shape: f32[8,256], index: 3, kind: input, shape index: {}]
  %s4 = inlined_call_operand.hbm [shape: f32[8,256], index: 4, kind: output, shape index: {}]
  %s5 = sld [smem:[#allocation0]]
  $region42: #{tpu_custom_call.1} parent=0
    _
  %s7 = ssub.s32 1, %s5
  %s8 = scalar_select 0, %s7, %s5
  $region1: #{tpu_custom_call.1} parent=0
    #allocation2 [shape = 'u8[1024]{0}', space=vmem, size = 0x400, scoped, tag = 'input window, operand 0, single buffered']
    #allocation3 [shape = 's32[1]{0}', space=sflag, size = 0x4, scoped, tag = 'scoped memory for tpu_custom_call.1']
    #allocation4 [shape = 's32[1]{0}', space=sflag, size = 0x4, scoped, tag = 'scoped memory for tpu_custom_call.1']
    #allocation5 [shape = 'u8[1024]{0}', space=vmem, size = 0x400, scoped, tag = 'input window, operand 1, single buffered']
    #allocation6 [shape = 's32[1]{0}', space=sflag, size = 0x4, scoped, tag = 'scoped memory for tpu_custom_call.1']
    #allocation7 [shape = 'u8[1024]{0}', space=vmem, size = 0x400, scoped, tag = 'input window, operand 2, single buffered']
    #allocation8 [shape = 'u8[8192]{0}', space=vmem, size = 0x2000, scoped, tag = 'input window, operand 3, single buffered']
    #allocation9 [shape = 's32[1]{0}', space=sflag, size = 0x4, scoped, tag = 'scoped memory for tpu_custom_call.1']
    #allocation10 [shape = 'u8[8192]{0}', space=vmem, size = 0x2000, scoped, tag = 'output window, operand 0, single buffered']
    %9 = vsyncpa [#allocation3], 0
    %10 = vsyncpa [#allocation6], 0
    %11 = vsyncpa [#allocation9], 0
    %12 = vsyncpa [#allocation4], 0
    // Predicated region
    $region2: #{tpu_custom_call.1} parent=1 // pred_check
      _
    $region3: #{tpu_custom_call.1} parent=1 // pred_check_branch
      %14 = sbr.rel (0) target = $region5
    $region4: #{tpu_custom_call.1} parent=1 // pred_region
      %16 = vsyncadd [#allocation3], 0
      %s18 = sshll.u32 %s0, 4
      %s19 = int_to_ptr.hbm [resolvable:$true] %s18
      %s20 = sshll.u32 [#allocation2], 4
      %s21 = int_to_ptr.vmem [resolvable:$true] %s20
      %23 = dma.hbm_to_vmem [thread:$0]  %s19, 32, %s21, [#allocation3]
    $region5: #{tpu_custom_call.1} parent=1 // pred_fallthru
      _
    // Predicated region
    $region6: #{tpu_custom_call.1} parent=1 // pred_check
      _
    $region7: #{tpu_custom_call.1} parent=1 // pred_check_branch
      %25 = sbr.rel (0) target = $region9
    $region8: #{tpu_custom_call.1} parent=1 // pred_region
      %27 = vsyncadd [#allocation6], 0
      %s29 = sshll.u32 %s1, 4
      %s30 = int_to_ptr.hbm [resolvable:$true] %s29
      %s31 = sshll.u32 [#allocation5], 4
      %s32 = int_to_ptr.vmem [resolvable:$true] %s31
      %34 = dma.hbm_to_vmem [thread:$0]  %s30, 32, %s32, [#allocation6]
    $region9: #{tpu_custom_call.1} parent=1 // pred_fallthru
      _
    // Predicated region
    $region10: #{tpu_custom_call.1} parent=1 // pred_check
      _
    $region11: #{tpu_custom_call.1} parent=1 // pred_check_branch
      %36 = sbr.rel (0) target = $region13
    $region12: #{tpu_custom_call.1} parent=1 // pred_region
      %38 = vsyncadd [#allocation6], 0
      %s40 = sshll.u32 %s2, 4
      %s41 = int_to_ptr.hbm [resolvable:$true] %s40
      %s42 = sshll.u32 [#allocation7], 4
      %s43 = int_to_ptr.vmem [resolvable:$true] %s42
      %45 = dma.hbm_to_vmem [thread:$0]  %s41, 32, %s43, [#allocation6]
    $region13: #{tpu_custom_call.1} parent=1 // pred_fallthru
      _
    // Predicated region
    $region14: #{tpu_custom_call.1} parent=1 // pred_check
      _
    $region15: #{tpu_custom_call.1} parent=1 // pred_check_branch
      %47 = sbr.rel (0) target = $region17
    $region16: #{tpu_custom_call.1} parent=1 // pred_region
      %49 = vsyncadd [#allocation9], 0
      %s51 = sshll.u32 %s3, 4
      %s52 = int_to_ptr.hbm [resolvable:$true] %s51
      %s53 = sshll.u32 [#allocation8], 4
      %s54 = int_to_ptr.vmem [resolvable:$true] %s53
      %56 = dma.hbm_to_vmem [thread:$0]  %s52, 256, %s54, [#allocation9]
    $region17: #{tpu_custom_call.1} parent=1 // pred_fallthru
      _
    // Predicated region
    $region18: #{tpu_custom_call.1} parent=1 // pred_check
      _
    $region19: #{tpu_custom_call.1} parent=1 // pred_check_branch
      %58 = sbr.rel (0) target = $region21
    $region20: #{tpu_custom_call.1} parent=1 // pred_region
      %60 = dma.done [#allocation3], 32
    $region21: #{tpu_custom_call.1} parent=1 // pred_fallthru
      _
    // Predicated region
    $region22: #{tpu_custom_call.1} parent=1 // pred_check
      _
    $region23: #{tpu_custom_call.1} parent=1 // pred_check_branch
      %62 = sbr.rel (0) target = $region25
    $region24: #{tpu_custom_call.1} parent=1 // pred_region
      %64 = dma.done [#allocation6], 32
    $region25: #{tpu_custom_call.1} parent=1 // pred_fallthru
      _
    // Predicated region
    $region26: #{tpu_custom_call.1} parent=1 // pred_check
      _
    $region27: #{tpu_custom_call.1} parent=1 // pred_check_branch
      %66 = sbr.rel (0) target = $region29
    $region28: #{tpu_custom_call.1} parent=1 // pred_region
      %68 = dma.done [#allocation6], 32
    $region29: #{tpu_custom_call.1} parent=1 // pred_fallthru
      _
    // Predicated region
    $region30: #{tpu_custom_call.1} parent=1 // pred_check
      _
    $region31: #{tpu_custom_call.1} parent=1 // pred_check_branch
      %70 = sbr.rel (0) target = $region33
    $region32: #{tpu_custom_call.1} parent=1 // pred_region
      %72 = dma.done [#allocation9], 256
    $region33: #{tpu_custom_call.1} parent=1 // pred_fallthru
      _
    %v73 = vld [vmem:[#allocation8] sm:$0xff]
    %v74 = vld [vmem:[#allocation8 + $0x8] sm:$0xff]
    %75 = vrot.lane.b32.xlu0 %v73, 112
    %v76 = vpop.permute.xlu0 %75
    %77 = vrot.lane.b32.xlu0 %v74, 112
    %v78 = vpop.permute.xlu0 %77
    %v79 = vlaneseq
    %v80 = vand.u32 %v79, 127
    %vm81 = vcmp.lt.s32.totalorder %v80, 112
    %v82 = vsel %vm81, %v76, %v78
    %v83 = vsel %vm81, %v78, %v76
    %84 = vrot.lane.b32.xlu0 %v73, 16
    %v85 = vpop.permute.xlu0 %84
    %86 = vrot.lane.b32.xlu0 %v74, 16
    %v87 = vpop.permute.xlu0 %86
    %vm88 = vcmp.lt.s32.totalorder %v80, 16
    %v89 = vsel %vm88, %v85, %v87
    %v90 = vsel %vm88, %v87, %v85
    %v91 = vld [vmem:[#allocation2] sm:$0x3]
    %v93 = vperm.slane %v91, 0
    %v94 = vperm.slane %v91, 1
    %v97 = vmul.f32 %v73, %v93
    %v98 = vmul.f32 %v74, %v94
    %v99 = vld [vmem:[#allocation5] sm:$0x3]
    %v101 = vperm.slane %v99, 0
    %v102 = vperm.slane %v99, 1
    %v105 = vmul.f32 %v82, %v101
    %v106 = vmul.f32 %v83, %v102
    %v107 = vadd.f32 %v97, %v105
    %v108 = vadd.f32 %v98, %v106
    %v109 = vld [vmem:[#allocation7] sm:$0x3]
    %v111 = vperm.slane %v109, 0
    %v112 = vperm.slane %v109, 1
    %v115 = vmul.f32 %v90, %v111
    %v116 = vmul.f32 %v89, %v112
    %v117 = vadd.f32 %v107, %v115
    %v118 = vadd.f32 %v108, %v116
    %119 = vst [vmem:[#allocation10] sm:$0xff] %v117
    %120 = vst [vmem:[#allocation10 + $0x8] sm:$0xff] %v118
    // Predicated region
    $region34: #{tpu_custom_call.1} parent=1 // pred_check
      _
    $region35: #{tpu_custom_call.1} parent=1 // pred_check_branch
      %122 = sbr.rel (0) target = $region37
    $region36: #{tpu_custom_call.1} parent=1 // pred_region
      %124 = vsyncadd [#allocation4], 0
      %s126 = sshll.u32 [#allocation10], 4
      %s127 = int_to_ptr.vmem [resolvable:$true] %s126
      %s128 = sshll.u32 %s4, 4
      %s129 = int_to_ptr.hbm [resolvable:$true] %s128
      %131 = dma.vmem_to_hbm [thread:$0]  %s127, 256, %s129, [#allocation4]
    $region37: #{tpu_custom_call.1} parent=1 // pred_fallthru
      _
    // Predicated region
    $region38: #{tpu_custom_call.1} parent=1 // pred_check
      _
    $region39: #{tpu_custom_call.1} parent=1 // pred_check_branch
      %133 = sbr.rel (0) target = $region41
    $region40: #{tpu_custom_call.1} parent=1 // pred_region
      %135 = dma.done [#allocation4], 256
    $region41: #{tpu_custom_call.1} parent=1 // pred_fallthru
      _
    %136 = vsyncpa [#allocation3], 1
    %137 = vsyncpa [#allocation6], 1
    %138 = vsyncpa [#allocation9], 1
    %139 = vsyncpa [#allocation4], 1

</llo_original>
